<compile_context>
chip_gen: v7x
topology: tpu7x:2x2x1
jax: 0.10.0
libtpu: 0.0.40
codegen_flags: <defaults>
</compile_context>

<pallas_src>
import functools

import jax
import jax.numpy as jnp
import numpy as np
from jax.experimental import pallas as pl
from jax.experimental.pallas import tpu as pltpu


def _round_up(x: int, m: int) -> int:
    return ((x + m - 1) // m) * m


def _pick_tile(n: int, align: int, max_tile: int) -> int:
    """Aligned tile size that covers `n` with minimal pad-to-tile waste."""
    n_al = _round_up(max(n, 1), align)
    if n_al <= max_tile:
        return n_al
    n_tiles = -(-n_al // max_tile)                   # ceil
    return _round_up(-(-n // n_tiles), align)        # <= max_tile (max_tile aligned)


def _l1_cost_kernel(pred_ref, gt_t_ref, out_ref, *, ndim, negate, compute_dtype):
    # pred_ref: (TQ, ndim)  gt_t_ref: (ndim, TG)  out_ref: (TQ, TG)
    p = pred_ref[...].astype(compute_dtype)          # (TQ, ndim), weight pre-folded
    g = gt_t_ref[...].astype(compute_dtype)          # (ndim, TG), weight pre-folded

    # Unrolled static loop over box coordinates (cx, cy, w, h): each term is a
    # (TQ,1)-(1,TG) broadcasted abs-difference accumulated on the VPU.
    acc = jnp.abs(p[:, 0:1] - g[0:1, :])
    for d in range(1, ndim):
        acc = acc + jnp.abs(p[:, d:d + 1] - g[d:d + 1, :])
    if negate:                                       # static; only for weight < 0
        acc = -acc
    out_ref[...] = acc.astype(out_ref.dtype)


def l1_cost(pred_bboxes: jax.Array,
            gt_bboxes: jax.Array,
            weight: float = 1.0,
            *,
            out_dtype=jnp.float32,
            compute_dtype=jnp.float32) -> jax.Array:
    """Pallas equivalent of L1Cost.forward.

    Args:
      pred_bboxes: (num_queries, 4) float array (normalized cx, cy, w, h).
      gt_bboxes:   (num_gt, 4) float array.
      weight:      scalar cost weight.
      out_dtype:   output dtype (bfloat16 is a cheap option on v5e/v6e).
      compute_dtype: accumulation dtype (bfloat16 helps v6e/v7x VALU; keep
        float32 on v5e / for exact parity with the PyTorch reference).
    Returns:
      (num_queries, num_gt) cost matrix scaled by `weight`.
    """
    q, ndim = pred_bboxes.shape
    g, ndim2 = gt_bboxes.shape
    assert ndim == ndim2

    if q == 0 or g == 0:
        return jnp.zeros((q, g), out_dtype)

    # Fold the weight into the tiny inputs: |w*p - w*g| = |w| * |p - g|.
    # Negative weight is handled by a static negate at the store.
    w = float(weight)
    scale = abs(w)
    negate = w < 0.0

    pred_f = pred_bboxes.astype(jnp.float32)
    gt_f = gt_bboxes.astype(jnp.float32)
    if scale != 1.0:
        pred_f = pred_f * scale
        gt_f = gt_f * scale

    # Tile sizes: Q on the sublane axis (multiple of 8), G on the lane axis
    # (multiple of 128), picked to minimize pad-to-tile waste.
    tq = _pick_tile(q, 8, 512)
    tg = _pick_tile(g, 128, 2048)
    q_pad = _round_up(q, tq)
    g_pad = _round_up(g, tg)

    # If the whole problem fits one tile, split Q so a v7x megacore can put
    # one tile on each TensorCore (cheap no-op-ish on single-TC v5e/v6e).
    if q_pad // tq == 1 and g_pad // tg == 1 and q >= 16:
        tq = _round_up(-(-q // 2), 8)
        q_pad = 2 * tq

    pred_p = pred_f
    if q_pad != q:
        pred_p = jnp.pad(pred_f, ((0, q_pad - q), (0, 0)))

    # Transpose gt to (ndim, G) in plain JAX so the gt axis lands on lanes,
    # then pad G up to the (128-multiple) tile width for dense, unmasked vst.
    gt_t = gt_f.T
    if g_pad != g:
        gt_t = jnp.pad(gt_t, ((0, 0), (0, g_pad - g)))

    grid = (q_pad // tq, g_pad // tg)  # Q outer, G inner -> pred slab resident
    kernel = functools.partial(
        _l1_cost_kernel, ndim=ndim, negate=negate, compute_dtype=compute_dtype)

    out = pl.pallas_call(
        kernel,
        out_shape=jax.ShapeDtypeStruct((q_pad, g_pad), out_dtype),
        grid=grid,
        in_specs=[
            # pred: same (TQ, ndim) slab for every G tile (index_map ignores j).
            pl.BlockSpec((tq, ndim), lambda i, j: (i, 0)),
            # gt^T: (ndim, TG) slab per G tile, shared across all Q tiles.
            pl.BlockSpec((ndim, tg), lambda i, j: (0, j)),
        ],
        out_specs=pl.BlockSpec((tq, tg), lambda i, j: (i, j)),
        compiler_params=pltpu.CompilerParams(
            dimension_semantics=("parallel", "parallel"),
        ),
    )(pred_p, gt_t)

    # Slice off padding only when it was actually added (extra HBM pass
    # otherwise avoided; padded rows/cols contain plausible-looking garbage).
    if q_pad != q or g_pad != g:
        out = out[:q, :g]
    return out


def _reference(pred_bboxes, gt_bboxes, weight=1.0):
    diff = jnp.abs(pred_bboxes[:, None, :] - gt_bboxes[None, :, :])
    return diff.sum(-1) * weight


if __name__ == "__main__":
    key = jax.random.PRNGKey(0)
    k1, k2, k3, k4, k5, k6 = jax.random.split(key, 6)

    # Small DETR-style shapes (single-tile case, forced 2-way Q split).
    num_queries, num_gt = 16, 8
    pred = jax.random.uniform(k1, (num_queries, 4), dtype=jnp.float32)  # (cx, cy, w, h) in [0, 1]
    gt = jax.random.uniform(k2, (num_gt, 4), dtype=jnp.float32)
    cost = jax.block_until_ready(l1_cost(pred, gt, weight=2.5))
    ref = _reference(pred, gt, weight=2.5)
    np.testing.assert_allclose(np.asarray(cost), np.asarray(ref), rtol=1e-5, atol=1e-5)

    # Non-multiple-of-(8,128) shapes: exercises padding + slicing.
    q2, g2 = 300, 37
    pred2 = jax.random.uniform(k3, (q2, 4), dtype=jnp.float32)
    gt2 = jax.random.uniform(k4, (g2, 4), dtype=jnp.float32)
    cost2 = jax.block_until_ready(l1_cost(pred2, gt2, weight=1.0))
    ref2 = _reference(pred2, gt2, weight=1.0)
    np.testing.assert_allclose(np.asarray(cost2), np.asarray(ref2), rtol=1e-5, atol=1e-5)

    # Negative weight path (static negate, weight magnitude folded into inputs).
    q3, g3 = 260, 200
    pred3 = jax.random.uniform(k5, (q3, 4), dtype=jnp.float32)
    gt3 = jax.random.uniform(k6, (g3, 4), dtype=jnp.float32)
    cost3 = jax.block_until_ready(l1_cost(pred3, gt3, weight=-0.5))
    ref3 = _reference(pred3, gt3, weight=-0.5)
    np.testing.assert_allclose(np.asarray(cost3), np.asarray(ref3), rtol=1e-5, atol=1e-5)

    print("KERNEL_OK")
</pallas_src>

<mosaic_0001>
module attributes {stable_mosaic.version = 11 : i64} {
  func.func @_l1_cost_kernel(%arg0: i32, %arg1: i32, %arg2: memref<8x4xf32, #tpu.memory_space<vmem>>, %arg3: memref<4x128xf32, #tpu.memory_space<vmem>>, %arg4: memref<8x128xf32, #tpu.memory_space<vmem>>) attributes {dimension_semantics = [#tpu.dimension_semantics<parallel>, #tpu.dimension_semantics<parallel>], iteration_bounds = array<i64: 2, 1>, scalar_prefetch = 0 : i64, scratch_operands = 0 : i64, tpu.core_type = #tpu.core_type<tc>, window_params = [{transform_indices = @transform_0, window_bounds = array<i64: 8, 4>}, {transform_indices = @transform_1, window_bounds = array<i64: 4, 128>}, {transform_indices = @transform_2, window_bounds = array<i64: 8, 128>}]} {
    %c0 = arith.constant 0 : index
    %c0_0 = arith.constant 0 : index
    %0 = vector.load %arg2[%c0, %c0_0] : memref<8x4xf32, #tpu.memory_space<vmem>>, vector<8x4xf32>
    %c0_1 = arith.constant 0 : index
    %c0_2 = arith.constant 0 : index
    %1 = vector.load %arg3[%c0_1, %c0_2] : memref<4x128xf32, #tpu.memory_space<vmem>>, vector<4x128xf32>
    %2 = vector.extract_strided_slice %0 {offsets = [0, 0], sizes = [8, 1], strides = [1, 1]} : vector<8x4xf32> to vector<8x1xf32>
    %3 = vector.extract_strided_slice %1 {offsets = [0, 0], sizes = [1, 128], strides = [1, 1]} : vector<4x128xf32> to vector<1x128xf32>
    %4 = vector.broadcast %2 : vector<8x1xf32> to vector<8x128xf32>
    %5 = vector.broadcast %3 : vector<1x128xf32> to vector<8x128xf32>
    %6 = arith.subf %4, %5 : vector<8x128xf32>
    %7 = math.absf %6 : vector<8x128xf32>
    %8 = vector.extract_strided_slice %0 {offsets = [0, 1], sizes = [8, 1], strides = [1, 1]} : vector<8x4xf32> to vector<8x1xf32>
    %9 = vector.extract_strided_slice %1 {offsets = [1, 0], sizes = [1, 128], strides = [1, 1]} : vector<4x128xf32> to vector<1x128xf32>
    %10 = vector.broadcast %8 : vector<8x1xf32> to vector<8x128xf32>
    %11 = vector.broadcast %9 : vector<1x128xf32> to vector<8x128xf32>
    %12 = arith.subf %10, %11 : vector<8x128xf32>
    %13 = math.absf %12 : vector<8x128xf32>
    %14 = arith.addf %7, %13 : vector<8x128xf32>
    %15 = vector.extract_strided_slice %0 {offsets = [0, 2], sizes = [8, 1], strides = [1, 1]} : vector<8x4xf32> to vector<8x1xf32>
    %16 = vector.extract_strided_slice %1 {offsets = [2, 0], sizes = [1, 128], strides = [1, 1]} : vector<4x128xf32> to vector<1x128xf32>
    %17 = vector.broadcast %15 : vector<8x1xf32> to vector<8x128xf32>
    %18 = vector.broadcast %16 : vector<1x128xf32> to vector<8x128xf32>
    %19 = arith.subf %17, %18 : vector<8x128xf32>
    %20 = math.absf %19 : vector<8x128xf32>
    %21 = arith.addf %14, %20 : vector<8x128xf32>
    %22 = vector.extract_strided_slice %0 {offsets = [0, 3], sizes = [8, 1], strides = [1, 1]} : vector<8x4xf32> to vector<8x1xf32>
    %23 = vector.extract_strided_slice %1 {offsets = [3, 0], sizes = [1, 128], strides = [1, 1]} : vector<4x128xf32> to vector<1x128xf32>
    %24 = vector.broadcast %22 : vector<8x1xf32> to vector<8x128xf32>
    %25 = vector.broadcast %23 : vector<1x128xf32> to vector<8x128xf32>
    %26 = arith.subf %24, %25 : vector<8x128xf32>
    %27 = math.absf %26 : vector<8x128xf32>
    %28 = arith.addf %21, %27 : vector<8x128xf32>
    %c0_3 = arith.constant 0 : index
    %c0_4 = arith.constant 0 : index
    %29 = vector.load %arg4[%c0_3, %c0_4] : memref<8x128xf32, #tpu.memory_space<vmem>>, vector<8x128xf32>
    tpu.vector_store %arg4[%c0_3, %c0_4], %28 {strides = array<i32>} : memref<8x128xf32, #tpu.memory_space<vmem>>, vector<8x128xf32>,
    return
  }
  func.func @transform_0(%arg0: i32, %arg1: i32) -> (i32, i32) {
    %c0_i32 = arith.constant 0 : i32
    %c0_i32_0 = arith.constant 0 : i32
    return %arg0, %c0_i32 : i32, i32
  }
  func.func @transform_1(%arg0: i32, %arg1: i32) -> (i32, i32) {
    %c0_i32 = arith.constant 0 : i32
    %c0_i32_0 = arith.constant 0 : i32
    return %c0_i32, %arg1 : i32, i32
  }
  func.func @transform_2(%arg0: i32, %arg1: i32) -> (i32, i32) {
    %c0_i32 = arith.constant 0 : i32
    return %arg0, %arg1 : i32, i32
  }
}

</mosaic_0001>

<llo_original>
// kernel: tpu_custom_call.1
$region0: #{tpu_custom_call.1}
  #allocation0 [shape = 'u32[]', space=smem, size = 0x4, offset = 0x4, fixed_abs, tag = 'smem constant byte address 0x4 - core index']
  #allocation1 [shape = 'u32[144,128]{1,0:T(1,128)}', space=vmem, size = 0x12000, scoped, tag = 'internal scratch']
  %s0 = inlined_call_operand.vmem [shape: f32[16,4], index: 0, kind: input, shape index: {}]
  %s1 = inlined_call_operand.vmem [shape: f32[4,128], index: 1, kind: input, shape index: {}]
  %s2 = inlined_call_operand.hbm [shape: f32[16,128], index: 2, kind: output, shape index: {}]
  %s3 = sld [smem:[#allocation0]]
  $region41: #{tpu_custom_call.1} parent=0
    _
  %s5 = ssub.s32 1, %s3
  %s6 = scalar_select 0, %s5, %s3
  $region1: #{tpu_custom_call.1} parent=0
    #allocation2 [shape = 'u8[8192]{0}', space=vmem, size = 0x2000, scoped, tag = 'output window, operand 0']
    #allocation3 [shape = 's32[2]{0}', space=sflag, size = 0x8, scoped, tag = 'scoped memory for tpu_custom_call.1']
    %7 = vsyncpa [#allocation3], 0
    %s8 = scalar_lea.sflag [#allocation3], 1
    %9 = vsyncpa %s8, 0
    loop: start=0, step=1, limit=4
    $region2: #{tpu_custom_call.1} parent=1 // loop_pre_header
      _
    $region3: #{tpu_custom_call.1} parent=1 // loop_header
      %s11 = sphi 0, %s15
      %p12 = scmp.ge.s32.totalorder %s11, 4
      %s18 = sphi 0, %s30
      %s19 = sphi 0, %s26
      %s20 = sphi 0, %s18
      %s21 = sphi 0, %s19
      %s22 = sphi 0, %s20
      %s23 = sphi 0, %s21
      %s33 = sphi 0, %s35
      %s36 = sphi 0, %s33
      %s37 = sphi 0, %s36
      %s53 = sphi 0, %s37
      %s59 = sphi 0, %s61
      %s62 = sphi 0, %s59
      %s63 = sphi 0, %s62
      %s79 = sphi 0, %s63
      %s87 = sphi 0, %s89
      %s90 = sphi 0, %s87
      %s91 = sphi 0, %s90
      %s107 = sphi 0, %s91
    $region4: #{tpu_custom_call.1} parent=1 // loop_header_branch
      %14 = sbr.rel (%p12) target = $region8
    $region5: #{tpu_custom_call.1} parent=1 // loop_body
      %s16 = ssub.s32 %s11, 1
      %s17 = ssub.s32 %s11, 2
      %s24 = sadd.s32 1, %s19
      %p25 = scmp.ge.s32.totalorder %s24, 1
      %s26 = scalar_select %p25, 0, %s24
      %s27 = sadd.s32 1, %s18
      %s28 = scalar_select %p25, %s27, %s18
      %p29 = scmp.ge.s32.totalorder %s28, 2
      %s30 = scalar_select %p29, 0, %s28
      %s31 = ssub.s32 %s18, %s30
      %p32 = scmp.eq.s32.totalorder %s31, 0
      %s34 = sadd.s32 %s33, 1
      %s35 = scalar_select %p32, %s33, %s34
      %p38 = pneg %p32
      %p39 = scmp.eq.s32.totalorder %s11, 1
      %p40 = por %p38, %p39
      %p41 = scmp.ne.s32.totalorder %s33, %s36
      %p42 = scmp.eq.s32.totalorder %s11, 0
      %p43 = por %p41, %p42
      %p44 = scmp.ne.s32.totalorder %s33, %s36
      %p45 = scmp.eq.s32.totalorder %s16, 1
      %p46 = por %p44, %p45
      %p47 = scmp.ne.s32.totalorder %s36, %s37
      %p48 = scmp.eq.s32.totalorder %s16, 0
      %p49 = por %p47, %p48
      %p50 = scmp.ne.s32.totalorder %s36, %s37
      %p51 = scmp.eq.s32.totalorder %s17, 1
      %p52 = por %p50, %p51
      %p54 = scmp.ne.s32.totalorder %s37, %s53
      %p55 = scmp.eq.s32.totalorder %s17, 0
      %p56 = por %p54, %p55
      %s57 = ssub.s32 %s19, %s26
      %p58 = scmp.eq.s32.totalorder %s57, 0
      %s60 = sadd.s32 %s59, 1
      %s61 = scalar_select %p58, %s59, %s60
      %p64 = pneg %p58
      %p65 = scmp.eq.s32.totalorder %s11, 1
      %p66 = por %p64, %p65
      %p67 = scmp.ne.s32.totalorder %s59, %s62
      %p68 = scmp.eq.s32.totalorder %s11, 0
      %p69 = por %p67, %p68
      %p70 = scmp.ne.s32.totalorder %s59, %s62
      %p71 = scmp.eq.s32.totalorder %s16, 1
      %p72 = por %p70, %p71
      %p73 = scmp.ne.s32.totalorder %s62, %s63
      %p74 = scmp.eq.s32.totalorder %s16, 0
      %p75 = por %p73, %p74
      %p76 = scmp.ne.s32.totalorder %s62, %s63
      %p77 = scmp.eq.s32.totalorder %s17, 1
      %p78 = por %p76, %p77
      %p80 = scmp.ne.s32.totalorder %s63, %s79
      %p81 = scmp.eq.s32.totalorder %s17, 0
      %p82 = por %p80, %p81
      %s83 = ssub.s32 %s18, %s30
      %s84 = ssub.s32 %s19, %s26
      %s85 = sor.u32 %s83, %s84
      %p86 = scmp.eq.s32.totalorder %s85, 0
      %s88 = sadd.s32 %s87, 1
      %s89 = scalar_select %p86, %s87, %s88
      %p92 = pneg %p86
      %p93 = scmp.eq.s32.totalorder %s11, 1
      %p94 = por %p92, %p93
      %p95 = scmp.ne.s32.totalorder %s87, %s90
      %p96 = scmp.eq.s32.totalorder %s11, 0
      %p97 = por %p95, %p96
      %p98 = scmp.ne.s32.totalorder %s87, %s90
      %p99 = scmp.eq.s32.totalorder %s16, 1
      %p100 = por %p98, %p99
      %p101 = scmp.ne.s32.totalorder %s90, %s91
      %p102 = scmp.eq.s32.totalorder %s16, 0
      %p103 = por %p101, %p102
      %p104 = scmp.ne.s32.totalorder %s90, %s91
      %p105 = scmp.eq.s32.totalorder %s17, 1
      %p106 = por %p104, %p105
      %p108 = scmp.ne.s32.totalorder %s91, %s107
      %p109 = scmp.eq.s32.totalorder %s17, 0
      %p110 = por %p108, %p109
      %p111 = scmp.le.s32.totalorder 1, %s11
      %p112 = scmp.lt.s32.totalorder %s11, 3
      %p113 = pnand %p111, %p112
      %p114 = pneg %p113
      // Predicated region
      $region9: #{tpu_custom_call.1} parent=5 // pred_check
        _
      $region10: #{tpu_custom_call.1} parent=5 // pred_check_branch
        %116 = sbr.rel (%p113) target = $region12
      $region11: #{tpu_custom_call.1} parent=5 // pred_region
        %s117 = ssub.s32 %s11, 1
        // Predicated region
        $region13: #{tpu_custom_call.1} parent=11 // pred_check
          %p118 = pneg %p75
        $region14: #{tpu_custom_call.1} parent=11 // pred_check_branch
          %120 = sbr.rel (%p118) target = $region16
        $region15: #{tpu_custom_call.1} parent=11 // pred_region
          %p121 = scmp.lt.s32.totalorder %s21, 0
          %s122 = scalar_select %p121, %s21, 0
          %s123 = smul.addr %s122, 4
          %s124 = scalar_lea.vmem %s1, %s123
        $region16: #{tpu_custom_call.1} parent=11 // pred_fallthru
          _
      $region12: #{tpu_custom_call.1} parent=5 // pred_fallthru
        _
      %p125 = scmp.lt.s32.totalorder %s11, 2
      // Predicated region
      $region17: #{tpu_custom_call.1} parent=5 // pred_check
        %p126 = pneg %p125
      $region18: #{tpu_custom_call.1} parent=5 // pred_check_branch
        %128 = sbr.rel (%p126) target = $region20
      $region19: #{tpu_custom_call.1} parent=5 // pred_region
        // Predicated region
        $region21: #{tpu_custom_call.1} parent=19 // pred_check
          %p129 = pneg %p43
        $region22: #{tpu_custom_call.1} parent=19 // pred_check_branch
          %131 = sbr.rel (%p129) target = $region24
        $region23: #{tpu_custom_call.1} parent=19 // pred_region
          %p132 = scmp.lt.s32.totalorder %s18, 1
          %s133 = scalar_select %p132, %s18, 1
          %s134 = smul.addr %s133, 8
          %s135 = scalar_lea.vmem %s0, %s134
        $region24: #{tpu_custom_call.1} parent=19 // pred_fallthru
          _
      $region20: #{tpu_custom_call.1} parent=5 // pred_fallthru
        _
      %p136 = scmp.le.s32.totalorder 1, %s11
      %p137 = scmp.lt.s32.totalorder %s11, 3
      %p138 = pnand %p136, %p137
      %p139 = pneg %p138
      // Predicated region
      $region25: #{tpu_custom_call.1} parent=5 // pred_check
        _
      $region26: #{tpu_custom_call.1} parent=5 // pred_check_branch
        %141 = sbr.rel (%p138) target = $region28
      $region27: #{tpu_custom_call.1} parent=5 // pred_region
        %s142 = ssub.s32 %s11, 1
        %p143 = scmp.lt.s32.totalorder %s20, 1
        %s144 = scalar_select %p143, %s20, 1
        %s145 = smul.addr %s144, 8
        %s146 = scalar_lea.vmem %s0, %s145
        %p147 = pneg %p49
        %p148 = pneg %p46
        %p149 = scmp.lt.s32.totalorder %s21, 0
        %s150 = scalar_select %p149, %s21, 0
        %s151 = smul.addr %s150, 4
        %s152 = scalar_lea.vmem %s1, %s151
        %p153 = pneg %p75
        %p154 = pneg %p72
        %p155 = pneg %p103
        %p156 = pneg %p100
        %s157 = sand.u32 %s90, 1
        %s158 = scalar_lea.sflag [#allocation3], %s157
        %s159 = sand.u32 %s90, 1
        %s160 = smul.addr %s159, 8
        %s161 = scalar_lea.vmem [#allocation2], %s160
        %p162 = scmp.lt.s32.totalorder %s20, 1
        %s163 = scalar_select %p162, %s20, 1
        %s164 = smul.addr %s163, 8
        %s165 = scalar_lea.vmem %s0, %s164
        %p166 = scmp.lt.s32.totalorder %s21, 0
        %s167 = scalar_select %p166, %s21, 0
        %s168 = smul.addr %s167, 4
        %s169 = scalar_lea.vmem %s1, %s168
        %v170 = vld [vmem:[%s165] sm:$0xff]
        %v171 = vld [vmem:[%s169] sm:$0xf]
        %173 = vset.pattern.permute.xlu0 0
        %174 = vperm.xlu0 %173, %v170
        %v175 = vpop.permute.xlu0 %174
        %v177 = vlaneseq
        %v178 = vshrl.u32 %v177, 7
        %v179 = vsub.s32 0, %v178
        %v180 = vrot.slane %v171, %v179
        %v181 = vsub.f32 %v175, %v180
        %v182 = vand.u32 2147483647, %v181
        %183 = vset.pattern.permute.xlu0 1
        %184 = vperm.xlu0 %183, %v170
        %v185 = vpop.permute.xlu0 %184
        %v187 = vlaneseq
        %v188 = vshrl.u32 %v187, 7
        %v189 = vsub.s32 1, %v188
        %v190 = vrot.slane %v171, %v189
        %v191 = vsub.f32 %v185, %v190
        %v192 = vand.u32 2147483647, %v191
        %v193 = vadd.f32 %v182, %v192
        %194 = vset.pattern.permute.xlu0 2
        %195 = vperm.xlu0 %194, %v170
        %v196 = vpop.permute.xlu0 %195
        %v198 = vlaneseq
        %v199 = vshrl.u32 %v198, 7
        %v200 = vsub.s32 2, %v199
        %v201 = vrot.slane %v171, %v200
        %v202 = vsub.f32 %v196, %v201
        %v203 = vand.u32 2147483647, %v202
        %v204 = vadd.f32 %v193, %v203
        %205 = vset.pattern.permute.xlu0 3
        %206 = vperm.xlu0 %205, %v170
        %v207 = vpop.permute.xlu0 %206
        %v209 = vlaneseq
        %v210 = vshrl.u32 %v209, 7
        %v211 = vsub.s32 3, %v210
        %v212 = vrot.slane %v171, %v211
        %v213 = vsub.f32 %v207, %v212
        %v214 = vand.u32 2147483647, %v213
        %v215 = vadd.f32 %v204, %v214
        %216 = vst [vmem:[%s161] sm:$0xff] %v215
        %s217 = sand.u32 %s90, 1
        %s218 = scalar_lea.sflag [#allocation3], %s217
        %s219 = sand.u32 %s90, 1
        %s220 = smul.addr %s219, 8
        %s221 = scalar_lea.vmem [#allocation2], %s220
        // Predicated region
        $region29: #{tpu_custom_call.1} parent=27 // pred_check
          %p222 = pneg %p100
        $region30: #{tpu_custom_call.1} parent=27 // pred_check_branch
          %224 = sbr.rel (%p222) target = $region32
        $region31: #{tpu_custom_call.1} parent=27 // pred_region
          %s226 = ssub.s32 128, 128
          %227 = vsyncadd %s218, %s226
          %s228 = sadd.s32 %s21, %s20
          %s229 = smul.addr %s228, 128
          %s230 = scalar_lea.hbm %s2, %s229
          %s232 = sshll.u32 %s221, 4
          %s233 = int_to_ptr.vmem [resolvable:$true] %s232
          %235 = dma.vmem_to_hbm [thread:$0]  %s233, 128, %s230, %s218
        $region32: #{tpu_custom_call.1} parent=27 // pred_fallthru
          _
      $region28: #{tpu_custom_call.1} parent=5 // pred_fallthru
        _
      %p236 = scmp.le.s32.totalorder 2, %s11
      // Predicated region
      $region33: #{tpu_custom_call.1} parent=5 // pred_check
        %p237 = pneg %p236
      $region34: #{tpu_custom_call.1} parent=5 // pred_check_branch
        %239 = sbr.rel (%p237) target = $region36
      $region35: #{tpu_custom_call.1} parent=5 // pred_region
        %s240 = ssub.s32 %s11, 2
        // Predicated region
        $region37: #{tpu_custom_call.1} parent=35 // pred_check
          %p241 = pneg %p106
        $region38: #{tpu_custom_call.1} parent=35 // pred_check_branch
          %243 = sbr.rel (%p241) target = $region40
        $region39: #{tpu_custom_call.1} parent=35 // pred_region
          %s244 = sand.u32 %s91, 1
          %s245 = scalar_lea.sflag [#allocation3], %s244
          %s246 = sand.u32 %s91, 1
          %s247 = smul.addr %s246, 8
          %s248 = scalar_lea.vmem [#allocation2], %s247
          %249 = dma.done %s245, 128
        $region40: #{tpu_custom_call.1} parent=35 // pred_fallthru
          _
      $region36: #{tpu_custom_call.1} parent=5 // pred_fallthru
        _
    $region6: #{tpu_custom_call.1} parent=1 // loop_footer
      %s15 = sadd.s32 1, %s11
    $region7: #{tpu_custom_call.1} parent=1 // loop_footer_branch
      %10 = sbr.rel target = $region3
    $region8: #{tpu_custom_call.1} parent=1 // loop_exit
      _
    %250 = vsyncpa [#allocation3], 1
    %s251 = scalar_lea.sflag [#allocation3], 1
    %252 = vsyncpa %s251, 1

</llo_original>
